<compile_context>
chip_gen: v7x
topology: tpu7x:2x2x1
jax: 0.10.0
libtpu: 0.0.40
codegen_flags: <defaults>
</compile_context>

<pallas_src>
import functools

import jax
import jax.numpy as jnp
from jax import lax
from jax.experimental import pallas as pl
from jax.experimental.pallas import tpu as pltpu

_X_TILE_BYTES = 8 * 1024 * 1024          # per x-buffer budget (review: 8-12 MiB)
_STREAM_TILE_C = 4096                    # class-tile width when streaming large C
_MAX_TILE_N = 512
_VMEM_LIMIT_BYTES = 48 * 1024 * 1024     # explicit: > v5e 16 MiB default, <= v7x 64 MiB phys.


def _round_up(v, m):
    return (v + m - 1) // m * m


def _choose_tiles(n, c, itemsize):
    """Pick (tile_n, tile_c, n_pad, c_pad) with one x tile <= ~8 MiB."""
    if c <= 128:
        tile_c = c                        # block dim == full array dim
        c_pad = c
    else:
        full_c = _round_up(c, 128)
        if full_c * itemsize * 8 <= _X_TILE_BYTES:
            tile_c = full_c               # whole class axis in one lane-aligned tile
            c_pad = full_c
        else:
            tile_c = max(128, min(_STREAM_TILE_C,
                                  _X_TILE_BYTES // (8 * itemsize)) // 128 * 128)
            c_pad = _round_up(c, tile_c)
    budget_rows = max(8, (_X_TILE_BYTES // (itemsize * tile_c)) // 8 * 8)
    tile_n = min(_MAX_TILE_N, budget_rows, _round_up(n, 8))
    if n > 8:
        # v7x has 2 TensorCores: make sure the "parallel" row axis has >= 2 tiles.
        tile_n = min(tile_n, _round_up(-(-n // 2), 8))
    n_pad = _round_up(n, tile_n)
    return tile_n, tile_c, n_pad, c_pad


def _label_smoothing_kernel(x_ref, tgt_ref, out_ref,
                            m_sc, l_sc, sumx_sc, xt_sc, *,
                            smoothing, num_classes, num_rows,
                            tile_n, tile_c, num_c_tiles, rem_cols):
    i = pl.program_id(0)                  # row-tile index ("parallel")
    j = pl.program_id(1)                  # class-tile index ("arbitrary", last)
    last_j = num_c_tiles - 1              # static

    @pl.when(j == 0)
    def _init():
        m_sc[...] = jnp.full_like(m_sc, -jnp.inf)
        l_sc[...] = jnp.zeros_like(l_sc)
        sumx_sc[...] = jnp.zeros_like(sumx_sc)
        xt_sc[...] = jnp.zeros_like(xt_sc)

    # Local (per-tile) column ids as a single row vector -- no full-tile iota,
    # no full-tile "+ j*tile_c" add (the target is shifted instead).
    col = lax.broadcasted_iota(jnp.int32, (1, tile_c), 1)

    def _update(mask_cols):
        x = x_ref[...].astype(jnp.float32)            # (tile_n, tile_c)
        tgt_local = tgt_ref[...] - j * tile_c         # (tile_n, 1), tiny

        if mask_cols:
            valid = col < rem_cols                    # (1, tile_c), rem_cols static
            x_for_max = jnp.where(valid, x, -jnp.inf)
            x_for_sum = jnp.where(valid, x, 0.0)
        else:
            x_for_max = x
            x_for_sum = x

        # Online log-sum-exp.
        blk_max = jnp.max(x_for_max, axis=-1, keepdims=True)   # (tile_n, 1)
        m_new = jnp.maximum(m_sc[...], blk_max)
        alpha = jnp.exp(m_sc[...] - m_new)
        p = jnp.exp(x_for_max - m_new)                          # padded cols -> 0
        l_sc[...] = alpha * l_sc[...] + jnp.sum(p, axis=-1, keepdims=True)
        m_sc[...] = m_new

        # Running row-sum of raw logits (smoothing term).
        sumx_sc[...] += jnp.sum(x_for_sum, axis=-1, keepdims=True)

        # Gather x[target] via broadcast compare + select + row reduce (no MXU).
        onehot = col == tgt_local                               # (tile_n, tile_c)
        xt_sc[...] += jnp.sum(jnp.where(onehot, x, 0.0), axis=-1, keepdims=True)

    if rem_cols == tile_c:
        # No class padding anywhere: unmasked fast path on every tile.
        _update(mask_cols=False)
    else:
        if num_c_tiles > 1:
            @pl.when(j != last_j)
            def _fast():
                _update(mask_cols=False)

        @pl.when(j == last_j)
        def _masked():
            _update(mask_cols=True)

    @pl.when(j == last_j)
    def _finalize():
        lse = m_sc[...] + jnp.log(l_sc[...])                    # (tile_n, 1)
        nll = lse - xt_sc[...]
        smooth = lse - sumx_sc[...] * (1.0 / num_classes)
        loss = (1.0 - smoothing) * nll + smoothing * smooth     # (tile_n, 1)

        # Zero out padded rows before the per-tile partial sum.
        row = lax.broadcasted_iota(jnp.int32, (tile_n, 1), 0) + i * tile_n
        loss = jnp.where(row < num_rows, loss, 0.0)

        out_ref[...] = jnp.broadcast_to(jnp.sum(loss), out_ref.shape)


def label_smoothing_loss(x, target, smoothing: float = 0.1, *,
                         tile_n: int | None = None, tile_c: int | None = None):
    """x: (N, C) float logits; target: (N,) int class indices. Returns scalar f32."""
    n, c = x.shape
    itemsize = jnp.dtype(x.dtype).itemsize
    tn, tc, n_pad, c_pad = _choose_tiles(n, c, itemsize)

    # Validate overrides against the (8, 128) tiling rule.
    if tile_n is not None:
        if tile_n % 8 != 0 and tile_n != n:
            raise ValueError("tile_n must be a multiple of 8 (or equal to N)")
        tn = tile_n
        n_pad = _round_up(n, tn)
    if tile_c is not None:
        if tile_c % 128 != 0 and tile_c != c:
            raise ValueError("tile_c must be a multiple of 128 (or equal to C)")
        tc = tile_c
        c_pad = _round_up(c, tc)

    x_p = x
    if (n_pad, c_pad) != (n, c):
        x_p = jnp.pad(x, ((0, n_pad - n), (0, c_pad - c)))
    tgt = target.astype(jnp.int32)
    if n_pad != n:
        tgt = jnp.pad(tgt, (0, n_pad - n))
    tgt2d = tgt.reshape(n_pad, 1)

    num_n = n_pad // tn
    num_c = c_pad // tc
    rem = c - (num_c - 1) * tc            # valid columns in the last class tile

    kernel = functools.partial(
        _label_smoothing_kernel,
        smoothing=float(smoothing), num_classes=c, num_rows=n,
        tile_n=tn, tile_c=tc, num_c_tiles=num_c, rem_cols=rem)

    cost = pl.CostEstimate(
        flops=8 * n_pad * c_pad,
        transcendentals=n_pad * c_pad,
        bytes_accessed=n_pad * c_pad * itemsize + n_pad * 4 + num_n * 128 * 4)

    partials = pl.pallas_call(
        kernel,
        out_shape=jax.ShapeDtypeStruct((num_n, 1, 128), jnp.float32),
        grid_spec=pltpu.PrefetchScalarGridSpec(
            num_scalar_prefetch=0,
            grid=(num_n, num_c),
            in_specs=[
                pl.BlockSpec((tn, tc), lambda i, j: (i, j)),   # x tile
                pl.BlockSpec((tn, 1), lambda i, j: (i, 0)),    # target rows
            ],
            out_specs=pl.BlockSpec((1, 1, 128), lambda i, j: (i, 0, 0)),
            scratch_shapes=[pltpu.VMEM((tn, 1), jnp.float32)] * 4,
        ),
        compiler_params=pltpu.CompilerParams(
            dimension_semantics=("parallel", "arbitrary"),
            vmem_limit_bytes=_VMEM_LIMIT_BYTES),
        cost_estimate=cost,
    )(x_p, tgt2d)

    # Tiny final reduction in the wrapper: sum per-tile partials, divide by true N.
    return jnp.sum(partials[:, 0, 0]) / jnp.float32(n)


def _reference(x, target, smoothing):
    confidence = 1.0 - smoothing
    logprobs = jax.nn.log_softmax(x.astype(jnp.float32), axis=-1)
    nll = -jnp.take_along_axis(logprobs, target[:, None], axis=-1)[:, 0]
    smooth = -jnp.mean(logprobs, axis=-1)
    return jnp.mean(confidence * nll + smoothing * smooth)


if __name__ == "__main__":
    key = jax.random.PRNGKey(0)
    smoothing = 0.1

    cases = [
        # (N, C, dtype, tile overrides) -- all small.
        (8, 32, jnp.float32, {}),                               # single block
        (10, 200, jnp.float32, {}),                             # row + class padding, 2 row tiles
        (24, 384, jnp.float32, {"tile_n": 8, "tile_c": 128}),   # 3x3 grid, streaming LSE, no class pad
        (16, 300, jnp.float32, {"tile_n": 8, "tile_c": 128}),   # streaming + masked last class tile
        (12, 160, jnp.bfloat16, {}),                            # bf16 DMA, f32 in-kernel math
    ]

    for idx, (N, C, dt, overrides) in enumerate(cases):
        kx, kt, key = jax.random.split(key, 3)
        x = jax.random.normal(kx, (N, C), dtype=dt)
        target = jax.random.randint(kt, (N,), 0, C, dtype=jnp.int32)

        loss = label_smoothing_loss(x, target, smoothing=smoothing, **overrides)
        loss = jax.block_until_ready(loss)

        ref = _reference(x, target, smoothing)
        assert jnp.allclose(loss, ref, atol=1e-5, rtol=1e-5), (idx, loss, ref)

    print("KERNEL_OK")
</pallas_src>

<mosaic_0001>
module attributes {stable_mosaic.version = 11 : i64} {
  func.func @_label_smoothing_kernel(%arg0: i32, %arg1: i32, %arg2: memref<8x32xf32, #tpu.memory_space<vmem>>, %arg3: memref<8x1xi32, #tpu.memory_space<vmem>>, %arg4: memref<1x1x128xf32, #tpu.memory_space<vmem>>, %arg5: memref<8x1xf32, #tpu.memory_space<vmem>>, %arg6: memref<8x1xf32, #tpu.memory_space<vmem>>, %arg7: memref<8x1xf32, #tpu.memory_space<vmem>>, %arg8: memref<8x1xf32, #tpu.memory_space<vmem>>) attributes {dimension_semantics = [#tpu.dimension_semantics<parallel>, #tpu.dimension_semantics<arbitrary>], iteration_bounds = array<i64: 1, 1>, scalar_prefetch = 0 : i64, scratch_operands = 4 : i64, tpu.core_type = #tpu.core_type<tc>, window_params = [{transform_indices = @transform_0, window_bounds = array<i64: 8, 32>}, {transform_indices = @transform_1, window_bounds = array<i64: 8, 1>}, {transform_indices = @transform_2, window_bounds = array<i64: 1, 1, 128>}]} {
    %c0_i32 = arith.constant 0 : i32
    %0 = arith.cmpi eq, %arg1, %c0_i32 : i32
    %1 = arith.extui %0 : i1 to i32
    %c0_i32_0 = arith.constant 0 : i32
    %2 = arith.cmpi ne, %1, %c0_i32_0 : i32
    scf.if %2 {
      %cst_28 = arith.constant 0xFF800000 : f32
      %44 = vector.broadcast %cst_28 : f32 to vector<8x1xf32>
      %c0_29 = arith.constant 0 : index
      %c0_30 = arith.constant 0 : index
      %45 = vector.load %arg5[%c0_29, %c0_30] : memref<8x1xf32, #tpu.memory_space<vmem>>, vector<8x1xf32>
      tpu.vector_store %arg5[%c0_29, %c0_30], %44 {strides = array<i32>} : memref<8x1xf32, #tpu.memory_space<vmem>>, vector<8x1xf32>,
      %cst_31 = arith.constant 0.000000e+00 : f32
      %46 = vector.broadcast %cst_31 : f32 to vector<8x1xf32>
      %c0_32 = arith.constant 0 : index
      %c0_33 = arith.constant 0 : index
      %47 = vector.load %arg6[%c0_32, %c0_33] : memref<8x1xf32, #tpu.memory_space<vmem>>, vector<8x1xf32>
      tpu.vector_store %arg6[%c0_32, %c0_33], %46 {strides = array<i32>} : memref<8x1xf32, #tpu.memory_space<vmem>>, vector<8x1xf32>,
      %cst_34 = arith.constant 0.000000e+00 : f32
      %48 = vector.broadcast %cst_34 : f32 to vector<8x1xf32>
      %c0_35 = arith.constant 0 : index
      %c0_36 = arith.constant 0 : index
      %49 = vector.load %arg7[%c0_35, %c0_36] : memref<8x1xf32, #tpu.memory_space<vmem>>, vector<8x1xf32>
      tpu.vector_store %arg7[%c0_35, %c0_36], %48 {strides = array<i32>} : memref<8x1xf32, #tpu.memory_space<vmem>>, vector<8x1xf32>,
      %cst_37 = arith.constant 0.000000e+00 : f32
      %50 = vector.broadcast %cst_37 : f32 to vector<8x1xf32>
      %c0_38 = arith.constant 0 : index
      %c0_39 = arith.constant 0 : index
      %51 = vector.load %arg8[%c0_38, %c0_39] : memref<8x1xf32, #tpu.memory_space<vmem>>, vector<8x1xf32>
      tpu.vector_store %arg8[%c0_38, %c0_39], %50 {strides = array<i32>} : memref<8x1xf32, #tpu.memory_space<vmem>>, vector<8x1xf32>,
    } else {
    }
    %3 = tpu.iota {dimensions = array<i32: 1>} : vector<1x32xi32>
    %c0 = arith.constant 0 : index
    %c0_1 = arith.constant 0 : index
    %4 = vector.load %arg2[%c0, %c0_1] : memref<8x32xf32, #tpu.memory_space<vmem>>, vector<8x32xf32>
    %c0_2 = arith.constant 0 : index
    %c0_3 = arith.constant 0 : index
    %5 = vector.load %arg3[%c0_2, %c0_3] : memref<8x1xi32, #tpu.memory_space<vmem>>, vector<8x1xi32>
    %c32_i32 = arith.constant 32 : i32
    %6 = arith.muli %arg1, %c32_i32 : i32
    %7 = vector.broadcast %6 : i32 to vector<8x1xi32>
    %8 = arith.subi %5, %7 : vector<8x1xi32>
    %cst = arith.constant dense<0xFF800000> : vector<8xf32>
    %9 = vector.multi_reduction <maximumf>, %4, %cst [1] : vector<8x32xf32> to vector<8xf32>
    %10 = vector.shape_cast %9 : vector<8xf32> to vector<8x1xf32>
    %c0_4 = arith.constant 0 : index
    %c0_5 = arith.constant 0 : index
    %11 = vector.load %arg5[%c0_4, %c0_5] : memref<8x1xf32, #tpu.memory_space<vmem>>, vector<8x1xf32>
    %12 = arith.maximumf %11, %10 : vector<8x1xf32>
    %c0_6 = arith.constant 0 : index
    %c0_7 = arith.constant 0 : index
    %13 = vector.load %arg5[%c0_6, %c0_7] : memref<8x1xf32, #tpu.memory_space<vmem>>, vector<8x1xf32>
    %14 = arith.subf %13, %12 : vector<8x1xf32>
    %15 = math.exp %14 : vector<8x1xf32>
    %16 = vector.broadcast %12 : vector<8x1xf32> to vector<8x32xf32>
    %17 = arith.subf %4, %16 : vector<8x32xf32>
    %18 = math.exp %17 : vector<8x32xf32>
    %c0_8 = arith.constant 0 : index
    %c0_9 = arith.constant 0 : index
    %19 = vector.load %arg6[%c0_8, %c0_9] : memref<8x1xf32, #tpu.memory_space<vmem>>, vector<8x1xf32>
    %20 = arith.mulf %15, %19 : vector<8x1xf32>
    %cst_10 = arith.constant dense<0.000000e+00> : vector<8xf32>
    %21 = vector.multi_reduction <add>, %18, %cst_10 [1] : vector<8x32xf32> to vector<8xf32>
    %22 = vector.shape_cast %21 : vector<8xf32> to vector<8x1xf32>
    %23 = arith.addf %20, %22 : vector<8x1xf32>
    %c0_11 = arith.constant 0 : index
    %c0_12 = arith.constant 0 : index
    %24 = vector.load %arg6[%c0_11, %c0_12] : memref<8x1xf32, #tpu.memory_space<vmem>>, vector<8x1xf32>
    tpu.vector_store %arg6[%c0_11, %c0_12], %23 {strides = array<i32>} : memref<8x1xf32, #tpu.memory_space<vmem>>, vector<8x1xf32>,
    %c0_13 = arith.constant 0 : index
    %c0_14 = arith.constant 0 : index
    %25 = vector.load %arg5[%c0_13, %c0_14] : memref<8x1xf32, #tpu.memory_space<vmem>>, vector<8x1xf32>
    tpu.vector_store %arg5[%c0_13, %c0_14], %12 {strides = array<i32>} : memref<8x1xf32, #tpu.memory_space<vmem>>, vector<8x1xf32>,
    %c0_15 = arith.constant 0 : index
    %c0_16 = arith.constant 0 : index
    %26 = vector.load %arg7[%c0_15, %c0_16] : memref<8x1xf32, #tpu.memory_space<vmem>>, vector<8x1xf32>
    %cst_17 = arith.constant dense<0.000000e+00> : vector<8xf32>
    %27 = vector.multi_reduction <add>, %4, %cst_17 [1] : vector<8x32xf32> to vector<8xf32>
    %28 = vector.shape_cast %27 : vector<8xf32> to vector<8x1xf32>
    %29 = arith.addf %26, %28 : vector<8x1xf32>
    %c0_18 = arith.constant 0 : index
    %c0_19 = arith.constant 0 : index
    %30 = vector.load %arg7[%c0_18, %c0_19] : memref<8x1xf32, #tpu.memory_space<vmem>>, vector<8x1xf32>
    tpu.vector_store %arg7[%c0_18, %c0_19], %29 {strides = array<i32>} : memref<8x1xf32, #tpu.memory_space<vmem>>, vector<8x1xf32>,
    %31 = vector.broadcast %3 : vector<1x32xi32> to vector<8x32xi32>
    %32 = vector.broadcast %8 : vector<8x1xi32> to vector<8x32xi32>
    %33 = arith.cmpi eq, %31, %32 : vector<8x32xi32>
    %c0_20 = arith.constant 0 : index
    %c0_21 = arith.constant 0 : index
    %34 = vector.load %arg8[%c0_20, %c0_21] : memref<8x1xf32, #tpu.memory_space<vmem>>, vector<8x1xf32>
    %cst_22 = arith.constant 0.000000e+00 : f32
    %35 = vector.broadcast %cst_22 : f32 to vector<8x32xf32>
    %36 = arith.select %33, %4, %35 : vector<8x32xi1>, vector<8x32xf32>
    %cst_23 = arith.constant dense<0.000000e+00> : vector<8xf32>
    %37 = vector.multi_reduction <add>, %36, %cst_23 [1] : vector<8x32xf32> to vector<8xf32>
    %38 = vector.shape_cast %37 : vector<8xf32> to vector<8x1xf32>
    %39 = arith.addf %34, %38 : vector<8x1xf32>
    %c0_24 = arith.constant 0 : index
    %c0_25 = arith.constant 0 : index
    %40 = vector.load %arg8[%c0_24, %c0_25] : memref<8x1xf32, #tpu.memory_space<vmem>>, vector<8x1xf32>
    tpu.vector_store %arg8[%c0_24, %c0_25], %39 {strides = array<i32>} : memref<8x1xf32, #tpu.memory_space<vmem>>, vector<8x1xf32>,
    %c0_i32_26 = arith.constant 0 : i32
    %41 = arith.cmpi eq, %arg1, %c0_i32_26 : i32
    %42 = arith.extui %41 : i1 to i32
    %c0_i32_27 = arith.constant 0 : i32
    %43 = arith.cmpi ne, %42, %c0_i32_27 : i32
    scf.if %43 {
      %c0_28 = arith.constant 0 : index
      %c0_29 = arith.constant 0 : index
      %44 = vector.load %arg5[%c0_28, %c0_29] : memref<8x1xf32, #tpu.memory_space<vmem>>, vector<8x1xf32>
      %c0_30 = arith.constant 0 : index
      %c0_31 = arith.constant 0 : index
      %45 = vector.load %arg6[%c0_30, %c0_31] : memref<8x1xf32, #tpu.memory_space<vmem>>, vector<8x1xf32>
      %46 = math.log %45 : vector<8x1xf32>
      %47 = arith.addf %44, %46 : vector<8x1xf32>
      %c0_32 = arith.constant 0 : index
      %c0_33 = arith.constant 0 : index
      %48 = vector.load %arg8[%c0_32, %c0_33] : memref<8x1xf32, #tpu.memory_space<vmem>>, vector<8x1xf32>
      %49 = arith.subf %47, %48 : vector<8x1xf32>
      %c0_34 = arith.constant 0 : index
      %c0_35 = arith.constant 0 : index
      %50 = vector.load %arg7[%c0_34, %c0_35] : memref<8x1xf32, #tpu.memory_space<vmem>>, vector<8x1xf32>
      %cst_36 = arith.constant 3.125000e-02 : f32
      %51 = vector.broadcast %cst_36 : f32 to vector<8x1xf32>
      %52 = arith.mulf %50, %51 : vector<8x1xf32>
      %53 = arith.subf %47, %52 : vector<8x1xf32>
      %cst_37 = arith.constant 0.899999976 : f32
      %54 = vector.broadcast %cst_37 : f32 to vector<8x1xf32>
      %55 = arith.mulf %54, %49 : vector<8x1xf32>
      %cst_38 = arith.constant 1.000000e-01 : f32
      %56 = vector.broadcast %cst_38 : f32 to vector<8x1xf32>
      %57 = arith.mulf %56, %53 : vector<8x1xf32>
      %58 = arith.addf %55, %57 : vector<8x1xf32>
      %59 = tpu.iota {dimensions = array<i32: 0>} : vector<8x1xi32>
      %c8_i32 = arith.constant 8 : i32
      %60 = arith.muli %arg0, %c8_i32 : i32
      %61 = vector.broadcast %60 : i32 to vector<8x1xi32>
      %62 = arith.addi %59, %61 : vector<8x1xi32>
      %c8_i32_39 = arith.constant 8 : i32
      %63 = vector.broadcast %c8_i32_39 : i32 to vector<8x1xi32>
      %64 = arith.cmpi slt, %62, %63 : vector<8x1xi32>
      %cst_40 = arith.constant 0.000000e+00 : f32
      %65 = vector.broadcast %cst_40 : f32 to vector<8x1xf32>
      %66 = arith.select %64, %58, %65 : vector<8x1xi1>, vector<8x1xf32>
      %67 = vector.shape_cast %66 : vector<8x1xf32> to vector<1x8x1xf32>
      %cst_41 = arith.constant dense<0.000000e+00> : vector<1xf32>
      %68 = vector.multi_reduction <add>, %67, %cst_41 [1, 2] : vector<1x8x1xf32> to vector<1xf32>
      %69 = vector.shape_cast %68 : vector<1xf32> to vector<1x1x1xf32>
      %70 = vector.extract %69[0, 0, 0] : f32 from vector<1x1x1xf32>
      %71 = vector.broadcast %70 : f32 to vector<1x1x128xf32>
      %c0_42 = arith.constant 0 : index
      %c0_43 = arith.constant 0 : index
      %c0_44 = arith.constant 0 : index
      %72 = vector.load %arg4[%c0_42, %c0_43, %c0_44] : memref<1x1x128xf32, #tpu.memory_space<vmem>>, vector<1x1x128xf32>
      tpu.vector_store %arg4[%c0_42, %c0_43, %c0_44], %71 {strides = array<i32>} : memref<1x1x128xf32, #tpu.memory_space<vmem>>, vector<1x1x128xf32>,
    } else {
    }
    return
  }
  func.func @transform_0(%arg0: i32, %arg1: i32) -> (i32, i32) {
    %c0_i32 = arith.constant 0 : i32
    return %arg0, %arg1 : i32, i32
  }
  func.func @transform_1(%arg0: i32, %arg1: i32) -> (i32, i32) {
    %c0_i32 = arith.constant 0 : i32
    %c0_i32_0 = arith.constant 0 : i32
    return %arg0, %c0_i32 : i32, i32
  }
  func.func @transform_2(%arg0: i32, %arg1: i32) -> (i32, i32, i32) {
    %c0_i32 = arith.constant 0 : i32
    %c0_i32_0 = arith.constant 0 : i32
    %c0_i32_1 = arith.constant 0 : i32
    return %arg0, %c0_i32, %c0_i32_0 : i32, i32, i32
  }
}

</mosaic_0001>

<llo_original>
// kernel: tpu_custom_call.1
$region0: #{tpu_custom_call.1}
  #allocation0 [shape = 'u32[]', space=smem, size = 0x4, offset = 0x4, fixed_abs, tag = 'smem constant byte address 0x4 - core index']
  #allocation1 [shape = 'u32[144,128]{1,0:T(1,128)}', space=vmem, size = 0x12000, scoped, tag = 'internal scratch']
  #allocation2 [shape = 'f32[8,1]{1,0:T(8,128)}', space=vmem, size = 0x1000, scoped, tag = 'scratch operand']
  #allocation3 [shape = 'f32[8,1]{1,0:T(8,128)}', space=vmem, size = 0x1000, scoped, tag = 'scratch operand']
  #allocation4 [shape = 'f32[8,1]{1,0:T(8,128)}', space=vmem, size = 0x1000, scoped, tag = 'scratch operand']
  #allocation5 [shape = 'f32[8,1]{1,0:T(8,128)}', space=vmem, size = 0x1000, scoped, tag = 'scratch operand']
  %s0 = inlined_call_operand.vmem [shape: f32[8,32], index: 0, kind: input, shape index: {}]
  %s1 = inlined_call_operand.vmem [shape: s32[8,1], index: 1, kind: input, shape index: {}]
  %s2 = inlined_call_operand.hbm [shape: f32[1,1,128], index: 2, kind: output, shape index: {}]
  %s3 = sld [smem:[#allocation0]]
  $region26: #{tpu_custom_call.1} parent=0
    _
  %s5 = ssub.s32 1, %s3
  %s6 = scalar_select 0, %s5, %s3
  $region1: #{tpu_custom_call.1} parent=0
    #allocation6 [shape = 'u8[512]{0}', space=vmem, size = 0x400, scoped, tag = 'output window, operand 0, single buffered']
    #allocation7 [shape = 's32[1]{0}', space=sflag, size = 0x4, scoped, tag = 'scoped memory for tpu_custom_call.1']
    %7 = vsyncpa [#allocation7], 0
    // Predicated region
    $region2: #{tpu_custom_call.1} parent=1 // pred_check
      _
    $region3: #{tpu_custom_call.1} parent=1 // pred_check_branch
      %9 = sbr.rel (0) target = $region5
    $region4: #{tpu_custom_call.1} parent=1 // pred_region
      _
    $region5: #{tpu_custom_call.1} parent=1 // pred_fallthru
      _
    // Predicated region
    $region6: #{tpu_custom_call.1} parent=1 // pred_check
      _
    $region7: #{tpu_custom_call.1} parent=1 // pred_check_branch
      %11 = sbr.rel (0) target = $region9
    $region8: #{tpu_custom_call.1} parent=1 // pred_region
      _
    $region9: #{tpu_custom_call.1} parent=1 // pred_fallthru
      _
    %p12 = scmp.eq.s32.totalorder 0, 0
    // Predicated region
    $region10: #{tpu_custom_call.1} parent=1 // pred_check
      %p13 = pneg %p12
    $region11: #{tpu_custom_call.1} parent=1 // pred_check_branch
      %15 = sbr.rel (%p13) target = $region13
    $region12: #{tpu_custom_call.1} parent=1 // pred_region
      %vm16 = vcmask 7168
      %17 = vst.msk [vmem:[#allocation2] sm:$0xff] %vm16, -inf
      %18 = vst.msk [vmem:[#allocation3] sm:$0xff] %vm16, 0.0
      %19 = vst.msk [vmem:[#allocation4] sm:$0xff] %vm16, 0.0
      %20 = vst.msk [vmem:[#allocation5] sm:$0xff] %vm16, 0.0
    $region13: #{tpu_custom_call.1} parent=1 // pred_fallthru
      _
    %v21 = vlaneseq
    %v22 = vand.u32 %v21, 127
    %v23 = vld [vmem:[%s0] sm:$0xff]
    %v24 = vld [vmem:[%s1] sm:$0xff]
    %s25 = smul.u32 0, 32
    %v26 = vstv %s25
    %v27 = vsub.s32 %v24, %v26
    %vm28 = vcmask 261120
    %v29 = vsel %vm28, %v23, -inf
    %30 = vmax.xlane.f32.xlu0 %v29
    %v31 = vpop.xlane.xlu0 %30
    %v32 = vld [vmem:[#allocation2] sm:$0xff]
    %v33 = vmax.f32 %v32, %v31
    %v34 = vsub.f32 %v32, %v33
    %v35 = vmul.f32 %v34, 1.442695
    %v36 = vpow.pop %v35
    %38 = vset.pattern.permute.xlu0 0
    %39 = vperm.xlu0 %38, %v33
    %v40 = vpop.permute.xlu0 %39
    %v42 = vsub.f32 %v23, %v40
    %v43 = vmul.f32 %v42, 1.442695
    %v44 = vpow.pop %v43
    %v45 = vld [vmem:[#allocation3] sm:$0xff]
    %v46 = vmul.f32 %v36, %v45
    %v47 = vsel %vm28, %v44, 0.0
    %48 = vadd.xlane.f32.xlu0 %v47
    %v49 = vpop.xlane.xlu0 %48
    %v50 = vadd.f32 %v46, %v49
    %vm51 = vcmask 7168
    %52 = vst.msk [vmem:[#allocation3] sm:$0xff] %vm51, %v50
    %53 = vst.msk [vmem:[#allocation2] sm:$0xff] %vm51, %v33
    %v54 = vld [vmem:[#allocation4] sm:$0xff]
    %v55 = vsel %vm28, %v23, 0.0
    %56 = vadd.xlane.f32.xlu0 %v55
    %v57 = vpop.xlane.xlu0 %56
    %v58 = vadd.f32 %v54, %v57
    %59 = vst.msk [vmem:[#allocation4] sm:$0xff] %vm51, %v58
    %60 = vset.pattern.permute.xlu0 0
    %61 = vperm.xlu0 %60, %v27
    %v62 = vpop.permute.xlu0 %61
    %vm63 = vcmp.eq.s32.totalorder %v22, %v62
    %v64 = vld [vmem:[#allocation5] sm:$0xff]
    %v65 = vsel %vm63, %v23, 0.0
    %v66 = vsel %vm28, %v65, 0.0
    %67 = vadd.xlane.f32.xlu0 %v66
    %v68 = vpop.xlane.xlu0 %67
    %v69 = vadd.f32 %v64, %v68
    %70 = vst.msk [vmem:[#allocation5] sm:$0xff] %vm51, %v69
    // Predicated region
    $region14: #{tpu_custom_call.1} parent=1 // pred_check
      %p71 = pneg %p12
    $region15: #{tpu_custom_call.1} parent=1 // pred_check_branch
      %73 = sbr.rel (%p71) target = $region17
    $region16: #{tpu_custom_call.1} parent=1 // pred_region
      %v74 = vld [vmem:[#allocation2] sm:$0xff]
      %v75 = vld [vmem:[#allocation3] sm:$0xff]
      %v76 = vlog2.pop %v75
      %v77 = vmul.f32 %v76, 0.6931472
      %v78 = vadd.f32 %v74, %v77
      %v79 = vld [vmem:[#allocation5] sm:$0xff]
      %v80 = vsub.f32 %v78, %v79
      %v81 = vld [vmem:[#allocation4] sm:$0xff]
      %v82 = vmul.f32 %v81, 0.03125
      %v83 = vsub.f32 %v78, %v82
      %v84 = vmul.f32 %v80, 0.9
      %v85 = vmul.f32 %v83, 0.1
      %v86 = vadd.f32 %v84, %v85
      %v87 = vlaneseq
      %v88 = vshrl.u32 %v87, 7
      %s89 = smul.u32 0, 8
      %v90 = vstv %s89
      %v91 = vadd.s32 %v88, %v90
      %vm92 = vcmp.lt.s32.totalorder %v91, 8
      %v93 = vsel %vm92, %v86, 0.0
      %v94 = vsel %vm51, %v93, 0.0
      %95 = vadd.xlane.f32.xlu0 %v94
      %v96 = vpop.xlane.xlu0 %95
      %v97 = vrot.slane %v96, 4
      %v98 = vadd.f32 %v96, %v97
      %v99 = vrot.slane %v98, 2
      %v100 = vadd.f32 %v98, %v99
      %v101 = vrot.slane %v100, 1
      %v102 = vadd.f32 %v100, %v101
      %s103 = vtos %v102
      %v104 = vstv %s103
      %105 = vst [vmem:[#allocation6] sm:$0x1] %v104
    $region17: #{tpu_custom_call.1} parent=1 // pred_fallthru
      _
    // Predicated region
    $region18: #{tpu_custom_call.1} parent=1 // pred_check
      _
    $region19: #{tpu_custom_call.1} parent=1 // pred_check_branch
      %107 = sbr.rel (0) target = $region21
    $region20: #{tpu_custom_call.1} parent=1 // pred_region
      %s109 = ssub.s32 16, 16
      %110 = vsyncadd [#allocation7], %s109
      %s112 = sshll.u32 [#allocation6], 4
      %s113 = int_to_ptr.vmem [resolvable:$true] %s112
      %115 = dma.vmem_to_hbm [thread:$0]  %s113, 16, %s2, [#allocation7]
    $region21: #{tpu_custom_call.1} parent=1 // pred_fallthru
      _
    // Predicated region
    $region22: #{tpu_custom_call.1} parent=1 // pred_check
      _
    $region23: #{tpu_custom_call.1} parent=1 // pred_check_branch
      %117 = sbr.rel (0) target = $region25
    $region24: #{tpu_custom_call.1} parent=1 // pred_region
      %118 = dma.done [#allocation7], 16
    $region25: #{tpu_custom_call.1} parent=1 // pred_fallthru
      _
    %119 = vsyncpa [#allocation7], 1

</llo_original>
